<compile_context>
chip_gen: v7x
topology: tpu7x:2x2x1
jax: 0.10.0
libtpu: 0.0.40
codegen_flags: <defaults>
</compile_context>

<pallas_src>
import jax
import jax.numpy as jnp
import numpy as np
from jax import lax
from jax.experimental import pallas as pl
from jax.experimental.pallas import tpu as pltpu


F_IN = 5          # real feature width
HIDDEN = 64       # GCNConv hidden width
F_PAD = 8         # 5-wide dims padded only to the sublane quantum
F_OUT_PAD = 128   # conv2 output padded to a full lane tile (unmasked stores)
G_PAD = 8         # graph-count padding
LANE = 128        # lane quantum (edge-axis padding)


# ---------------------------------------------------------------------------
# Fused Pallas kernel: normalize A -> conv1 -> conv2 -> per-graph edge-dot sum
# ---------------------------------------------------------------------------
def fused_gnn_kernel(a_ref, x_ref, w1_ref, b1_ref, w2_ref, b2_ref,
                     xs_t_ref, xt_t_ref, eg_ref, w_ref,
                     h2_ref, out_ref):
    # --- fused GCN normalization (A+I arrives as exact bf16 integers) -------
    a = a_ref[...].astype(jnp.float32)                           # (N, N)
    deg = jnp.sum(a, axis=1, keepdims=True)                      # (N, 1)
    dinv = 1.0 / jnp.sqrt(deg)                                   # (N, 1)
    # a_norm = dinv_row * a * dinv_col, applied as  dinv * (a @ (dinv * Z)).

    # --- conv1: h1 = A_hat @ (X @ W1) + b1  (reference matmul order) --------
    xw = jnp.dot(x_ref[...], w1_ref[...],
                 preferred_element_type=jnp.float32)             # (N, 64)
    h1 = dinv * jnp.dot(a, dinv * xw,
                        preferred_element_type=jnp.float32) + b1_ref[...]

    # --- conv2: h2 = A_hat @ (h1 @ W2) + b2 ----------------------------------
    # W2/b2 zero-padded to 128 lanes: same MXU cycles, unmasked full-lane vst.
    hw = jnp.dot(h1, w2_ref[...],
                 preferred_element_type=jnp.float32)             # (N, 128)
    h2_ref[...] = dinv * jnp.dot(a, dinv * hw,
                                 preferred_element_type=jnp.float32) + b2_ref[...]

    # --- per-graph sum of edge dot-products on ORIGINAL node features -------
    # Edge tables are (F_PAD, E_PAD): E on the 128-lane axis -> full VPU lanes;
    # the 8-row feature reduction is a sublane (XLU) reduce.
    prod = xs_t_ref[...] * xt_t_ref[...]                         # (F_PAD, E_PAD)
    dots = jnp.sum(prod, axis=0, keepdims=True)                  # (1, E_PAD)
    # one-hot segment matrix built in-kernel (padded edges carry graph id -1)
    gids = lax.broadcasted_iota(jnp.int32, (eg_ref.shape[0], G_PAD), 1)
    onehot = (eg_ref[...] == gids).astype(jnp.float32)           # (E_PAD, G_PAD)
    pg = jnp.dot(dots, onehot, preferred_element_type=jnp.float32)  # (1, G_PAD)
    out_ref[...] = pg * w_ref[0, 0]                              # scaled by w


def fused_gnn(a_raw, x_p, w1_p, b1, w2_p, b2_p, xs_t, xt_t, eg_col, w_scalar):
    N = a_raw.shape[0]
    vmem = pl.BlockSpec(memory_space=pltpu.MemorySpace.VMEM)
    smem = pl.BlockSpec(memory_space=pltpu.MemorySpace.SMEM)
    return pl.pallas_call(
        fused_gnn_kernel,
        out_shape=(jax.ShapeDtypeStruct((N, F_OUT_PAD), jnp.float32),  # h2 slab
                   jax.ShapeDtypeStruct((1, G_PAD), jnp.float32)),     # per-graph out
        in_specs=[vmem] * 9 + [smem],
        out_specs=(vmem, vmem),
        compiler_params=pltpu.CompilerParams(
            vmem_limit_bytes=32 * 1024 * 1024,
        ),
    )(a_raw, x_p, w1_p, b1, w2_p, b2_p, xs_t, xt_t, eg_col, w_scalar)


# ---------------------------------------------------------------------------
# Forward pass (glue in plain JAX; everything hot in the single Pallas call)
# ---------------------------------------------------------------------------
def build_raw_adj(num_nodes, edge_index):
    # Unnormalized A(+I); the D^-1/2 normalization is fused into the kernel.
    # NOTE (review): like the reference, this double counts if the input edge
    # list already contains self-loops / duplicate edges.
    A = jnp.zeros((num_nodes, num_nodes), jnp.float32)
    A = A.at[edge_index[1], edge_index[0]].add(1.0)   # A[dst, src]
    A = A + jnp.eye(num_nodes, dtype=jnp.float32)
    return A.astype(jnp.bfloat16)                      # small exact ints -> lossless


def gnn_forward(params, x, edge_index, edge_graph, num_graphs):
    N = x.shape[0]
    E = edge_index.shape[1]
    E_PAD = ((E + LANE - 1) // LANE) * LANE

    a_raw = build_raw_adj(N, edge_index)

    # narrow (5 -> 8) pads for node/weight tables
    x_p = jnp.zeros((N, F_PAD), jnp.float32).at[:, :F_IN].set(x)
    w1_p = jnp.zeros((F_PAD, HIDDEN), jnp.float32).at[:F_IN, :].set(params["W1"])
    b1 = params["b1"][None, :]
    # conv2 weights padded to 128 output lanes (lane-dense, unmasked h2 stores)
    w2_p = jnp.zeros((HIDDEN, F_OUT_PAD), jnp.float32).at[:, :F_IN].set(params["W2"])
    b2_p = jnp.zeros((1, F_OUT_PAD), jnp.float32).at[0, :F_IN].set(params["b2"])

    # edge endpoint features, transposed so E maps to the 128-lane axis
    xs_t = jnp.zeros((F_PAD, E_PAD), jnp.float32).at[:, :E].set(x_p[edge_index[0]].T)
    xt_t = jnp.zeros((F_PAD, E_PAD), jnp.float32).at[:, :E].set(x_p[edge_index[1]].T)
    # edge -> graph ids as a column; padded edges get -1 (match no graph)
    eg_col = jnp.full((E_PAD, 1), -1, jnp.int32).at[:E, 0].set(edge_graph)

    w_scalar = params["w"].reshape(1, 1).astype(jnp.float32)

    h2_p, out_row = fused_gnn(a_raw, x_p, w1_p, b1, w2_p, b2_p,
                              xs_t, xt_t, eg_col, w_scalar)

    out = out_row[0, :num_graphs]          # per-graph sums already scaled by w
    return out, h2_p[:, :F_IN]


# ---------------------------------------------------------------------------
# Pure-JAX reference (mirrors the PyTorch semantics)
# ---------------------------------------------------------------------------
def build_norm_adj_ref(num_nodes, edge_index):
    A = jnp.zeros((num_nodes, num_nodes), jnp.float32)
    A = A.at[edge_index[1], edge_index[0]].add(1.0)
    A = A + jnp.eye(num_nodes, dtype=jnp.float32)
    dinv = 1.0 / jnp.sqrt(A.sum(axis=1))
    return (dinv[:, None] * A) * dinv[None, :]


def ref_forward(params, x, edge_index, edge_graph, num_graphs):
    N = x.shape[0]
    a_hat = build_norm_adj_ref(N, edge_index)
    h1 = a_hat @ (x @ params["W1"]) + params["b1"]
    h2 = a_hat @ (h1 @ params["W2"]) + params["b2"]
    dots = jnp.sum(x[edge_index[0]] * x[edge_index[1]], axis=1)
    sums = jnp.zeros((num_graphs,), jnp.float32).at[edge_graph].add(dots)
    return sums * params["w"], h2


if __name__ == "__main__":
    key = jax.random.PRNGKey(0)
    k1, k2, k3, k4, k5, k6 = jax.random.split(key, 6)

    # deterministic parameter init (shapes from GNN.__init__)
    params = {
        "W1": jax.random.normal(k1, (F_IN, HIDDEN), jnp.float32) * 0.1,
        "b1": jax.random.normal(k2, (HIDDEN,), jnp.float32) * 0.1,
        "W2": jax.random.normal(k3, (HIDDEN, F_IN), jnp.float32) * 0.1,
        "b2": jax.random.normal(k4, (F_IN,), jnp.float32) * 0.1,
        "w": jax.random.uniform(k5, (1,), jnp.float32),   # torch.rand(1)
    }

    # TODO(synk): no csv / torch_geometric dataset — build a small synthetic
    # batch of 2 ring graphs with 8 nodes each and 5-d node features instead.
    num_graphs = 2
    nodes_per_graph = 8
    N = num_graphs * nodes_per_graph
    src, dst, eg = [], [], []
    for g in range(num_graphs):
        for i in range(nodes_per_graph):
            a = g * nodes_per_graph + i
            b = g * nodes_per_graph + (i + 1) % nodes_per_graph
            src += [a, b]
            dst += [b, a]
            eg += [g, g]
    edge_index = jnp.array([src, dst], dtype=jnp.int32)   # (2, 32)
    edge_graph = jnp.array(eg, dtype=jnp.int32)           # (32,)
    x = jax.random.normal(k6, (N, F_IN), jnp.float32)     # node features

    out, h2 = gnn_forward(params, x, edge_index, edge_graph, num_graphs)
    out = jax.block_until_ready(out)
    h2 = jax.block_until_ready(h2)

    out_ref, h2_ref = ref_forward(params, x, edge_index, edge_graph, num_graphs)

    np.testing.assert_allclose(np.asarray(out), np.asarray(out_ref),
                               rtol=1e-5, atol=1e-5)
    np.testing.assert_allclose(np.asarray(h2), np.asarray(h2_ref),
                               rtol=1e-4, atol=1e-4)
    print("KERNEL_OK")
</pallas_src>

<mosaic_0001>
module attributes {stable_mosaic.version = 11 : i64} {
  func.func @fused_gnn_kernel(%arg0: memref<16x16xbf16, #tpu.memory_space<vmem>>, %arg1: memref<16x8xf32, #tpu.memory_space<vmem>>, %arg2: memref<8x64xf32, #tpu.memory_space<vmem>>, %arg3: memref<1x64xf32, #tpu.memory_space<vmem>>, %arg4: memref<64x128xf32, #tpu.memory_space<vmem>>, %arg5: memref<1x128xf32, #tpu.memory_space<vmem>>, %arg6: memref<8x128xf32, #tpu.memory_space<vmem>>, %arg7: memref<8x128xf32, #tpu.memory_space<vmem>>, %arg8: memref<128x1xi32, #tpu.memory_space<vmem>>, %arg9: memref<1x1xf32, #tpu.memory_space<smem>>, %arg10: memref<16x128xf32, #tpu.memory_space<vmem>>, %arg11: memref<1x8xf32, #tpu.memory_space<vmem>>) attributes {dimension_semantics = [], scalar_prefetch = 0 : i64, scratch_operands = 0 : i64, tpu.core_type = #tpu.core_type<tc>} {
    %c0 = arith.constant 0 : index
    %c0_0 = arith.constant 0 : index
    %0 = vector.load %arg0[%c0, %c0_0] : memref<16x16xbf16, #tpu.memory_space<vmem>>, vector<16x16xbf16>
    %1 = arith.extf %0 : vector<16x16xbf16> to vector<16x16xf32>
    %cst = arith.constant dense<0.000000e+00> : vector<16xf32>
    %2 = vector.multi_reduction <add>, %1, %cst [1] : vector<16x16xf32> to vector<16xf32>
    %3 = vector.shape_cast %2 : vector<16xf32> to vector<16x1xf32>
    %4 = math.sqrt %3 : vector<16x1xf32>
    %cst_1 = arith.constant 1.000000e+00 : f32
    %5 = vector.broadcast %cst_1 : f32 to vector<16x1xf32>
    %6 = arith.divf %5, %4 : vector<16x1xf32>
    %c0_2 = arith.constant 0 : index
    %c0_3 = arith.constant 0 : index
    %7 = vector.load %arg1[%c0_2, %c0_3] : memref<16x8xf32, #tpu.memory_space<vmem>>, vector<16x8xf32>
    %c0_4 = arith.constant 0 : index
    %c0_5 = arith.constant 0 : index
    %8 = vector.load %arg2[%c0_4, %c0_5] : memref<8x64xf32, #tpu.memory_space<vmem>>, vector<8x64xf32>
    %cst_6 = arith.constant dense<0.000000e+00> : vector<16x64xf32>
    %9 = tpu.matmul %7, %8, %cst_6 {dimension_numbers = #tpu.dot_dimension_numbers<[1], [0], [0], [1], [0, 0, 1, 1], [], []>} : vector<16x8xf32>, vector<8x64xf32>, vector<16x64xf32> -> vector<16x64xf32>
    %10 = vector.broadcast %6 : vector<16x1xf32> to vector<16x64xf32>
    %11 = arith.mulf %10, %9 : vector<16x64xf32>
    %cst_7 = arith.constant dense<0.000000e+00> : vector<16x64xf32>
    %12 = tpu.matmul %1, %11, %cst_7 {dimension_numbers = #tpu.dot_dimension_numbers<[1], [0], [0], [1], [0, 0, 1, 1], [], []>} : vector<16x16xf32>, vector<16x64xf32>, vector<16x64xf32> -> vector<16x64xf32>
    %13 = vector.broadcast %6 : vector<16x1xf32> to vector<16x64xf32>
    %14 = arith.mulf %13, %12 : vector<16x64xf32>
    %c0_8 = arith.constant 0 : index
    %c0_9 = arith.constant 0 : index
    %15 = vector.load %arg3[%c0_8, %c0_9] : memref<1x64xf32, #tpu.memory_space<vmem>>, vector<1x64xf32>
    %16 = vector.broadcast %15 : vector<1x64xf32> to vector<16x64xf32>
    %17 = arith.addf %14, %16 : vector<16x64xf32>
    %c0_10 = arith.constant 0 : index
    %c0_11 = arith.constant 0 : index
    %18 = vector.load %arg4[%c0_10, %c0_11] : memref<64x128xf32, #tpu.memory_space<vmem>>, vector<64x128xf32>
    %cst_12 = arith.constant dense<0.000000e+00> : vector<16x128xf32>
    %19 = tpu.matmul %17, %18, %cst_12 {dimension_numbers = #tpu.dot_dimension_numbers<[1], [0], [0], [1], [0, 0, 1, 1], [], []>} : vector<16x64xf32>, vector<64x128xf32>, vector<16x128xf32> -> vector<16x128xf32>
    %20 = vector.broadcast %6 : vector<16x1xf32> to vector<16x128xf32>
    %21 = arith.mulf %20, %19 : vector<16x128xf32>
    %cst_13 = arith.constant dense<0.000000e+00> : vector<16x128xf32>
    %22 = tpu.matmul %1, %21, %cst_13 {dimension_numbers = #tpu.dot_dimension_numbers<[1], [0], [0], [1], [0, 0, 1, 1], [], []>} : vector<16x16xf32>, vector<16x128xf32>, vector<16x128xf32> -> vector<16x128xf32>
    %23 = vector.broadcast %6 : vector<16x1xf32> to vector<16x128xf32>
    %24 = arith.mulf %23, %22 : vector<16x128xf32>
    %c0_14 = arith.constant 0 : index
    %c0_15 = arith.constant 0 : index
    %25 = vector.load %arg5[%c0_14, %c0_15] : memref<1x128xf32, #tpu.memory_space<vmem>>, vector<1x128xf32>
    %26 = vector.broadcast %25 : vector<1x128xf32> to vector<16x128xf32>
    %27 = arith.addf %24, %26 : vector<16x128xf32>
    %c0_16 = arith.constant 0 : index
    %c0_17 = arith.constant 0 : index
    %28 = vector.load %arg10[%c0_16, %c0_17] : memref<16x128xf32, #tpu.memory_space<vmem>>, vector<16x128xf32>
    tpu.vector_store %arg10[%c0_16, %c0_17], %27 {strides = array<i32>} : memref<16x128xf32, #tpu.memory_space<vmem>>, vector<16x128xf32>,
    %c0_18 = arith.constant 0 : index
    %c0_19 = arith.constant 0 : index
    %29 = vector.load %arg6[%c0_18, %c0_19] : memref<8x128xf32, #tpu.memory_space<vmem>>, vector<8x128xf32>
    %c0_20 = arith.constant 0 : index
    %c0_21 = arith.constant 0 : index
    %30 = vector.load %arg7[%c0_20, %c0_21] : memref<8x128xf32, #tpu.memory_space<vmem>>, vector<8x128xf32>
    %31 = arith.mulf %29, %30 : vector<8x128xf32>
    %cst_22 = arith.constant dense<0.000000e+00> : vector<128xf32>
    %32 = vector.multi_reduction <add>, %31, %cst_22 [0] : vector<8x128xf32> to vector<128xf32>
    %33 = vector.shape_cast %32 : vector<128xf32> to vector<1x128xf32>
    %34 = tpu.iota {dimensions = array<i32: 1>} : vector<128x8xi32>
    %c0_23 = arith.constant 0 : index
    %c0_24 = arith.constant 0 : index
    %35 = vector.load %arg8[%c0_23, %c0_24] : memref<128x1xi32, #tpu.memory_space<vmem>>, vector<128x1xi32>
    %36 = vector.broadcast %35 : vector<128x1xi32> to vector<128x8xi32>
    %37 = arith.cmpi eq, %36, %34 : vector<128x8xi32>
    %38 = arith.extui %37 : vector<128x8xi1> to vector<128x8xi32>
    %39 = arith.sitofp %38 : vector<128x8xi32> to vector<128x8xf32>
    %cst_25 = arith.constant dense<0.000000e+00> : vector<1x8xf32>
    %40 = tpu.matmul %33, %39, %cst_25 {dimension_numbers = #tpu.dot_dimension_numbers<[1], [0], [0], [1], [0, 0, 1, 1], [], []>} : vector<1x128xf32>, vector<128x8xf32>, vector<1x8xf32> -> vector<1x8xf32>
    %c0_26 = arith.constant 0 : index
    %c0_27 = arith.constant 0 : index
    %41 = memref.load %arg9[%c0_26, %c0_27] : memref<1x1xf32, #tpu.memory_space<smem>>
    %42 = vector.broadcast %41 : f32 to vector<1x8xf32>
    %43 = arith.mulf %40, %42 : vector<1x8xf32>
    %c0_28 = arith.constant 0 : index
    %c0_29 = arith.constant 0 : index
    %44 = vector.load %arg11[%c0_28, %c0_29] : memref<1x8xf32, #tpu.memory_space<vmem>>, vector<1x8xf32>
    tpu.vector_store %arg11[%c0_28, %c0_29], %43 {strides = array<i32>} : memref<1x8xf32, #tpu.memory_space<vmem>>, vector<1x8xf32>,
    return
  }
}

</mosaic_0001>

<llo_original>
// kernel: tpu_custom_call.1
$region0: #{tpu_custom_call.1}
  #allocation0 [shape = 'u32[]', space=smem, size = 0x4, offset = 0x4, fixed_abs, tag = 'smem constant byte address 0x4 - core index']
  #allocation1 [shape = 'u32[144,128]{1,0:T(1,128)}', space=vmem, size = 0x12000, scoped, tag = 'internal scratch']
  #allocation2 [shape = 'f32[1,1]{1,0:T(1,128)S(6)}', space=smem, size = 0x200, scoped, tag = 'scoped memory for tpu_custom_call.1']
  %s0 = inlined_call_operand.vmem [shape: bf16[16,16], index: 0, kind: input, shape index: {}]
  %s1 = inlined_call_operand.vmem [shape: f32[16,8], index: 1, kind: input, shape index: {}]
  %s2 = inlined_call_operand.vmem [shape: f32[8,64], index: 2, kind: input, shape index: {}]
  %s3 = inlined_call_operand.vmem [shape: f32[1,64], index: 3, kind: input, shape index: {}]
  %s4 = inlined_call_operand.vmem [shape: f32[64,128], index: 4, kind: input, shape index: {}]
  %s5 = inlined_call_operand.vmem [shape: f32[1,128], index: 5, kind: input, shape index: {}]
  %s6 = inlined_call_operand.vmem [shape: f32[8,128], index: 6, kind: input, shape index: {}]
  %s7 = inlined_call_operand.vmem [shape: f32[8,128], index: 7, kind: input, shape index: {}]
  %s8 = inlined_call_operand.vmem [shape: s32[128,1], index: 8, kind: input, shape index: {}]
  %s9 = inlined_call_operand.<no memory space> [shape: f32[1,1], index: 9, kind: input, shape index: {}]
  %s10 = inlined_call_operand.hbm [shape: f32[16,128], index: 10, kind: output, shape index: {0}]
  %s11 = inlined_call_operand.hbm [shape: f32[1,8], index: 11, kind: output, shape index: {1}]
  %12 = xla_tuple %s10, %s11
  %s13 = sld [smem:[#allocation0]]
  $region58: #{tpu_custom_call.1} parent=0
    _
  %s15 = ssub.s32 1, %s13
  %s16 = scalar_select 0, %s15, %s13
  %17 = sst [smem:[#allocation2]] %s9
  $region1: #{tpu_custom_call.1} parent=0
    #allocation3 [shape = 'u8[8192]{0}', space=vmem, size = 0x2000, scoped, tag = 'output window, operand 0, single buffered']
    #allocation4 [shape = 's32[1]{0}', space=sflag, size = 0x4, scoped, tag = 'scoped memory for tpu_custom_call.1']
    #allocation5 [shape = 'u8[512]{0}', space=vmem, size = 0x400, scoped, tag = 'output window, operand 1, single buffered']
    #allocation6 [shape = 's32[1]{0}', space=sflag, size = 0x4, scoped, tag = 'scoped memory for tpu_custom_call.1']
    %18 = vsyncpa [#allocation4], 0
    %19 = vsyncpa [#allocation6], 0
    // Predicated region
    $region2: #{tpu_custom_call.1} parent=1 // pred_check
      _
    $region3: #{tpu_custom_call.1} parent=1 // pred_check_branch
      %21 = sbr.rel (0) target = $region5
    $region4: #{tpu_custom_call.1} parent=1 // pred_region
      _
    $region5: #{tpu_custom_call.1} parent=1 // pred_fallthru
      _
    // Predicated region
    $region6: #{tpu_custom_call.1} parent=1 // pred_check
      _
    $region7: #{tpu_custom_call.1} parent=1 // pred_check_branch
      %23 = sbr.rel (0) target = $region9
    $region8: #{tpu_custom_call.1} parent=1 // pred_region
      _
    $region9: #{tpu_custom_call.1} parent=1 // pred_fallthru
      _
    // Predicated region
    $region10: #{tpu_custom_call.1} parent=1 // pred_check
      _
    $region11: #{tpu_custom_call.1} parent=1 // pred_check_branch
      %25 = sbr.rel (0) target = $region13
    $region12: #{tpu_custom_call.1} parent=1 // pred_region
      _
    $region13: #{tpu_custom_call.1} parent=1 // pred_fallthru
      _
    // Predicated region
    $region14: #{tpu_custom_call.1} parent=1 // pred_check
      _
    $region15: #{tpu_custom_call.1} parent=1 // pred_check_branch
      %27 = sbr.rel (0) target = $region17
    $region16: #{tpu_custom_call.1} parent=1 // pred_region
      _
    $region17: #{tpu_custom_call.1} parent=1 // pred_fallthru
      _
    // Predicated region
    $region18: #{tpu_custom_call.1} parent=1 // pred_check
      _
    $region19: #{tpu_custom_call.1} parent=1 // pred_check_branch
      %29 = sbr.rel (0) target = $region21
    $region20: #{tpu_custom_call.1} parent=1 // pred_region
      _
    $region21: #{tpu_custom_call.1} parent=1 // pred_fallthru
      _
    // Predicated region
    $region22: #{tpu_custom_call.1} parent=1 // pred_check
      _
    $region23: #{tpu_custom_call.1} parent=1 // pred_check_branch
      %31 = sbr.rel (0) target = $region25
    $region24: #{tpu_custom_call.1} parent=1 // pred_region
      _
    $region25: #{tpu_custom_call.1} parent=1 // pred_fallthru
      _
    // Predicated region
    $region26: #{tpu_custom_call.1} parent=1 // pred_check
      _
    $region27: #{tpu_custom_call.1} parent=1 // pred_check_branch
      %33 = sbr.rel (0) target = $region29
    $region28: #{tpu_custom_call.1} parent=1 // pred_region
      _
    $region29: #{tpu_custom_call.1} parent=1 // pred_fallthru
      _
    // Predicated region
    $region30: #{tpu_custom_call.1} parent=1 // pred_check
      _
    $region31: #{tpu_custom_call.1} parent=1 // pred_check_branch
      %35 = sbr.rel (0) target = $region33
    $region32: #{tpu_custom_call.1} parent=1 // pred_region
      _
    $region33: #{tpu_custom_call.1} parent=1 // pred_fallthru
      _
    // Predicated region
    $region34: #{tpu_custom_call.1} parent=1 // pred_check
      _
    $region35: #{tpu_custom_call.1} parent=1 // pred_check_branch
      %37 = sbr.rel (0) target = $region37
    $region36: #{tpu_custom_call.1} parent=1 // pred_region
      _
    $region37: #{tpu_custom_call.1} parent=1 // pred_fallthru
      _
    // Predicated region
    $region38: #{tpu_custom_call.1} parent=1 // pred_check
      _
    $region39: #{tpu_custom_call.1} parent=1 // pred_check_branch
      %39 = sbr.rel (0) target = $region41
    $region40: #{tpu_custom_call.1} parent=1 // pred_region
      _
    $region41: #{tpu_custom_call.1} parent=1 // pred_fallthru
      _
    %v40 = vld [vmem:[%s0] sm:$0xf]
    %v41 = vld [vmem:[%s0 + $0x4] sm:$0xf]
    %v42 = vunpack.c.l.bf16 %v40
    %v43 = vunpack.c.l.bf16 %v41
    %vm44 = vcmask 130048
    %v45 = vsel %vm44, %v42, 0.0
    %46 = vadd.xlane.f32.xlu0 %v45
    %v47 = vpop.xlane.xlu0 %46
    %v48 = vsel %vm44, %v43, 0.0
    %49 = vadd.xlane.f32.xlu0 %v48
    %v50 = vpop.xlane.xlu0 %49
    %v51 = vrsqrt.pop %v47
    %v52 = vmul.f32 %v47, %v51
    %vm53 = vcmp.eq.f32.partialorder %v47, inf
    %v54 = vsel %vm53, %v47, %v52
    %vm55 = vcmp.eq.f32.partialorder %v47, 0.0
    %v56 = vand.u32 %v47, 2147483648
    %v57 = vsel %vm55, %v56, %v54
    %v58 = vrsqrt.pop %v50
    %v59 = vmul.f32 %v50, %v58
    %vm60 = vcmp.eq.f32.partialorder %v50, inf
    %v61 = vsel %vm60, %v50, %v59
    %vm62 = vcmp.eq.f32.partialorder %v50, 0.0
    %v63 = vand.u32 %v50, 2147483648
    %v64 = vsel %vm62, %v63, %v61
    %v65 = vrcp.pop %v57
    %v66 = vmul.f32 1.0, %v65
    %v67 = vrcp.pop %v64
    %v68 = vmul.f32 1.0, %v67
    %v69 = vld [vmem:[%s1] sm:$0xff]
    %v70 = vld [vmem:[%s1 + $0x8] sm:$0xff]
    %v71 = vld [vmem:[%s2] sm:$0xff]
    %vm72 = vcmask 64512
    %v74 = vsel %vm72, %v69, 0
    %v77 = vsel %vm72, %v70, 0
    %79 = vmatprep.subr.mxu0 0.0
    %80 = vmatpush1.msra.mxu0 %v71
    %81 = vmatprep.subr.mxu0 0.0
    %82 = vmatpush1.msra.mxu0 0.0
    %83 = vmatprep.subr.mxu0 0.0
    %84 = vmatpush1.msra.mxu0 0.0
    %85 = vmatprep.subr.mxu0 0.0
    %86 = vmatpush1.msra.mxu0 0.0
    %87 = vmatprep.subr.mxu0 0.0
    %88 = vmatpush1.msra.mxu0 0.0
    %89 = vmatprep.subr.mxu0 0.0
    %90 = vmatpush1.msra.mxu0 0.0
    %91 = vmatprep.subr.mxu0 0.0
    %92 = vmatpush1.msra.mxu0 0.0
    %93 = vmatprep.subr.mxu0 0.0
    %94 = vmatpush1.msra.mxu0 0.0
    %95 = vmatprep.subr.mxu0 0.0
    %96 = vmatpush1.msra.mxu0 0.0
    %97 = vmatprep.subr.mxu0 0.0
    %98 = vmatpush1.msra.mxu0 0.0
    %99 = vmatprep.subr.mxu0 0.0
    %100 = vmatpush1.msra.mxu0 0.0
    %101 = vmatprep.subr.mxu0 0.0
    %102 = vmatpush1.msra.mxu0 0.0
    %103 = vmatprep.subr.mxu0 0.0
    %104 = vmatpush1.msra.mxu0 0.0
    %105 = vmatprep.subr.mxu0 0.0
    %106 = vmatpush1.msra.mxu0 0.0
    %107 = vmatprep.subr.mxu0 0.0
    %108 = vmatpush1.msra.mxu0 0.0
    %109 = vmatprep.subr.mxu0 0.0
    %110 = vmatpush1.msra.mxu0 0.0
    %111 = vmatprep.subr.mxu0 0.0
    %112 = vmatpush1.msra.mxu0 0.0
    %113 = vmatprep.subr.mxu0 0.0
    %114 = vmatpush1.msra.mxu0 0.0
    %115 = vmatprep.subr.mxu0 0.0
    %116 = vmatpush1.msra.mxu0 0.0
    %117 = vmatprep.subr.mxu0 0.0
    %118 = vmatpush1.msra.mxu0 0.0
    %119 = vmatprep.subr.mxu0 0.0
    %120 = vmatpush1.msra.mxu0 0.0
    %121 = vmatprep.subr.mxu0 0.0
    %122 = vmatpush1.msra.mxu0 0.0
    %123 = vmatprep.subr.mxu0 0.0
    %124 = vmatpush1.msra.mxu0 0.0
    %125 = vmatprep.subr.mxu0 0.0
    %126 = vmatpush1.msra.mxu0 0.0
    %127 = vmatprep.subr.mxu0 0.0
    %128 = vmatpush1.msra.mxu0 0.0
    %129 = vmatprep.subr.mxu0 0.0
    %130 = vmatpush1.msra.mxu0 0.0
    %131 = vmatprep.subr.mxu0 0.0
    %132 = vmatpush1.msra.mxu0 0.0
    %133 = vmatprep.subr.mxu0 0.0
    %134 = vmatpush1.msra.mxu0 0.0
    %135 = vmatprep.subr.mxu0 0.0
    %136 = vmatpush1.msra.mxu0 0.0
    %137 = vmatprep.subr.mxu0 0.0
    %138 = vmatpush1.msra.mxu0 0.0
    %139 = vmatprep.subr.mxu0 0.0
    %140 = vmatpush1.msra.mxu0 0.0
    %141 = vmatprep.subr.mxu0 0.0
    %142 = vmatpush1.msra.mxu0 0.0
    %143 = vmatprep.mubr.f32.mxu0 0.0
    %144 = vmatmul.mubr.f32.gmra.mrb[0].mxu0 %v74
    %v145 = vpop.f32.mrb[0].mxu0
    %v146 = vadd.f32 0.0, %v145
    %v147 = vpop.f32.mrb[0].mxu0
    %148 = vmatprep.mubr.f32.mxu0 0.0
    %149 = vmatmul.mubr.f32.gmra.mrb[0].mxu0 %v77
    %v150 = vpop.f32.mrb[0].mxu0
    %v151 = vadd.f32 0.0, %v150
    %v152 = vpop.f32.mrb[0].mxu0
    %153 = vdwg.mxu0
    %v154 = vmul.f32 %v66, %v146
    %v155 = vmul.f32 %v68, %v151
    %v157 = vsel %vm44, %v42, 0
    %v160 = vsel %vm44, %v43, 0
    %162 = vmatprep.subr.mxu0 0.0
    %163 = vmatpush1.msra.mxu0 %v154
    %164 = vmatprep.subr.mxu0 0.0
    %165 = vmatpush1.msra.mxu0 %v155
    %166 = vmatprep.subr.mxu0 0.0
    %167 = vmatpush1.msra.mxu0 0.0
    %168 = vmatprep.subr.mxu0 0.0
    %169 = vmatpush1.msra.mxu0 0.0
    %170 = vmatprep.subr.mxu0 0.0
    %171 = vmatpush1.msra.mxu0 0.0
    %172 = vmatprep.subr.mxu0 0.0
    %173 = vmatpush1.msra.mxu0 0.0
    %174 = vmatprep.subr.mxu0 0.0
    %175 = vmatpush1.msra.mxu0 0.0
    %176 = vmatprep.subr.mxu0 0.0
    %177 = vmatpush1.msra.mxu0 0.0
    %178 = vmatprep.subr.mxu0 0.0
    %179 = vmatpush1.msra.mxu0 0.0
    %180 = vmatprep.subr.mxu0 0.0
    %181 = vmatpush1.msra.mxu0 0.0
    %182 = vmatprep.subr.mxu0 0.0
    %183 = vmatpush1.msra.mxu0 0.0
    %184 = vmatprep.subr.mxu0 0.0
    %185 = vmatpush1.msra.mxu0 0.0
    %186 = vmatprep.subr.mxu0 0.0
    %187 = vmatpush1.msra.mxu0 0.0
    %188 = vmatprep.subr.mxu0 0.0
    %189 = vmatpush1.msra.mxu0 0.0
    %190 = vmatprep.subr.mxu0 0.0
    %191 = vmatpush1.msra.mxu0 0.0
    %192 = vmatprep.subr.mxu0 0.0
    %193 = vmatpush1.msra.mxu0 0.0
    %194 = vmatprep.subr.mxu0 0.0
    %195 = vmatpush1.msra.mxu0 0.0
    %196 = vmatprep.subr.mxu0 0.0
    %197 = vmatpush1.msra.mxu0 0.0
    %198 = vmatprep.subr.mxu0 0.0
    %199 = vmatpush1.msra.mxu0 0.0
    %200 = vmatprep.subr.mxu0 0.0
    %201 = vmatpush1.msra.mxu0 0.0
    %202 = vmatprep.subr.mxu0 0.0
    %203 = vmatpush1.msra.mxu0 0.0
    %204 = vmatprep.subr.mxu0 0.0
    %205 = vmatpush1.msra.mxu0 0.0
    %206 = vmatprep.subr.mxu0 0.0
    %207 = vmatpush1.msra.mxu0 0.0
    %208 = vmatprep.subr.mxu0 0.0
    %209 = vmatpush1.msra.mxu0 0.0
    %210 = vmatprep.subr.mxu0 0.0
    %211 = vmatpush1.msra.mxu0 0.0
    %212 = vmatprep.subr.mxu0 0.0
    %213 = vmatpush1.msra.mxu0 0.0
    %214 = vmatprep.subr.mxu0 0.0
    %215 = vmatpush1.msra.mxu0 0.0
    %216 = vmatprep.subr.mxu0 0.0
    %217 = vmatpush1.msra.mxu0 0.0
    %218 = vmatprep.subr.mxu0 0.0
    %219 = vmatpush1.msra.mxu0 0.0
    %220 = vmatprep.subr.mxu0 0.0
    %221 = vmatpush1.msra.mxu0 0.0
    %222 = vmatprep.subr.mxu0 0.0
    %223 = vmatpush1.msra.mxu0 0.0
    %224 = vmatprep.subr.mxu0 0.0
    %225 = vmatpush1.msra.mxu0 0.0
    %226 = vmatprep.mubr.f32.mxu0 0.0
    %227 = vmatmul.mubr.f32.gmra.mrb[0].mxu0 %v157
    %v228 = vpop.f32.mrb[0].mxu0
    %v229 = vadd.f32 0.0, %v228
    %v230 = vpop.f32.mrb[0].mxu0
    %231 = vmatprep.mubr.f32.mxu0 0.0
    %232 = vmatmul.mubr.f32.gmra.mrb[0].mxu0 %v160
    %v233 = vpop.f32.mrb[0].mxu0
    %v234 = vadd.f32 0.0, %v233
    %v235 = vpop.f32.mrb[0].mxu0
    %236 = vdwg.mxu0
    %v237 = vmul.f32 %v66, %v229
    %v238 = vmul.f32 %v68, %v234
    %v239 = vld [vmem:[%s3] sm:$0x1]
    %v241 = vlaneseq
    %v242 = vshrl.u32 %v241, 7
    %v243 = vsub.s32 0, %v242
    %v244 = vrot.slane %v239, %v243
    %v246 = vadd.f32 %v237, %v244
    %v247 = vadd.f32 %v238, %v244
    %v248 = vld [vmem:[%s4] sm:$0xff]
    %v249 = vld [vmem:[%s4 + $0x8] sm:$0xff]
    %v250 = vld [vmem:[%s4 + $0x10] sm:$0xff]
    %v251 = vld [vmem:[%s4 + $0x18] sm:$0xff]
    %v252 = vld [vmem:[%s4 + $0x20] sm:$0xff]
    %v253 = vld [vmem:[%s4 + $0x28] sm:$0xff]
    %v254 = vld [vmem:[%s4 + $0x30] sm:$0xff]
    %v255 = vld [vmem:[%s4 + $0x38] sm:$0xff]
    %vm256 = vcmask 523264
    %v258 = vsel %vm256, %v246, 0
    %v261 = vsel %vm256, %v247, 0
    %263 = vmatprep.subr.mxu0 0.0
    %264 = vmatpush1.msra.mxu0 %v248
    %265 = vmatprep.subr.mxu0 0.0
    %266 = vmatpush1.msra.mxu0 %v249
    %267 = vmatprep.subr.mxu0 0.0
    %268 = vmatpush1.msra.mxu0 %v250
    %269 = vmatprep.subr.mxu0 0.0
    %270 = vmatpush1.msra.mxu0 %v251
    %271 = vmatprep.subr.mxu0 0.0
    %272 = vmatpush1.msra.mxu0 %v252
    %273 = vmatprep.subr.mxu0 0.0
    %274 = vmatpush1.msra.mxu0 %v253
    %275 = vmatprep.subr.mxu0 0.0
    %276 = vmatpush1.msra.mxu0 %v254
    %277 = vmatprep.subr.mxu0 0.0
    %278 = vmatpush1.msra.mxu0 %v255
    %279 = vmatprep.subr.mxu0 0.0
    %280 = vmatpush1.msra.mxu0 0.0
    %281 = vmatprep.subr.mxu0 0.0
    %282 = vmatpush1.msra.mxu0 0.0
    %283 = vmatprep.subr.mxu0 0.0
    %284 = vmatpush1.msra.mxu0 0.0
    %285 = vmatprep.subr.mxu0 0.0
    %286 = vmatpush1.msra.mxu0 0.0
    %287 = vmatprep.subr.mxu0 0.0
    %288 = vmatpush1.msra.mxu0 0.0
    %289 = vmatprep.subr.mxu0 0.0
    %290 = vmatpush1.msra.mxu0 0.0
    %291 = vmatprep.subr.mxu0 0.0
    %292 = vmatpush1.msra.mxu0 0.0
    %293 = vmatprep.subr.mxu0 0.0
    %294 = vmatpush1.msra.mxu0 0.0
    %295 = vmatprep.subr.mxu0 0.0
    %296 = vmatpush1.msra.mxu0 0.0
    %297 = vmatprep.subr.mxu0 0.0
    %298 = vmatpush1.msra.mxu0 0.0
    %299 = vmatprep.subr.mxu0 0.0
    %300 = vmatpush1.msra.mxu0 0.0
    %301 = vmatprep.subr.mxu0 0.0
    %302 = vmatpush1.msra.mxu0 0.0
    %303 = vmatprep.subr.mxu0 0.0
    %304 = vmatpush1.msra.mxu0 0.0
    %305 = vmatprep.subr.mxu0 0.0
    %306 = vmatpush1.msra.mxu0 0.0
    %307 = vmatprep.subr.mxu0 0.0
    %308 = vmatpush1.msra.mxu0 0.0
    %309 = vmatprep.subr.mxu0 0.0
    %310 = vmatpush1.msra.mxu0 0.0
    %311 = vmatprep.subr.mxu0 0.0
    %312 = vmatpush1.msra.mxu0 0.0
    %313 = vmatprep.subr.mxu0 0.0
    %314 = vmatpush1.msra.mxu0 0.0
    %315 = vmatprep.subr.mxu0 0.0
    %316 = vmatpush1.msra.mxu0 0.0
    %317 = vmatprep.subr.mxu0 0.0
    %318 = vmatpush1.msra.mxu0 0.0
    %319 = vmatprep.subr.mxu0 0.0
    %320 = vmatpush1.msra.mxu0 0.0
    %321 = vmatprep.subr.mxu0 0.0
    %322 = vmatpush1.msra.mxu0 0.0
    %323 = vmatprep.subr.mxu0 0.0
    %324 = vmatpush1.msra.mxu0 0.0
    %325 = vmatprep.subr.mxu0 0.0
    %326 = vmatpush1.msra.mxu0 0.0
    %327 = vmatprep.mubr.f32.mxu0 0.0
    %328 = vmatmul.mubr.f32.gmra.mrb[0].mxu0 %v258
    %v329 = vpop.f32.mrb[0].mxu0
    %v330 = vadd.f32 0.0, %v329
    %v331 = vpop.f32.mrb[0].mxu0
    %332 = vmatprep.mubr.f32.mxu0 0.0
    %333 = vmatmul.mubr.f32.gmra.mrb[0].mxu0 %v261
    %v334 = vpop.f32.mrb[0].mxu0
    %v335 = vadd.f32 0.0, %v334
    %v336 = vpop.f32.mrb[0].mxu0
    %337 = vdwg.mxu0
    %v338 = vmul.f32 %v66, %v330
    %v339 = vmul.f32 %v68, %v335
    %340 = vmatprep.subr.mxu0 0.0
    %341 = vmatpush1.msra.mxu0 %v338
    %342 = vmatprep.subr.mxu0 0.0
    %343 = vmatpush1.msra.mxu0 %v339
    %344 = vmatprep.subr.mxu0 0.0
    %345 = vmatpush1.msra.mxu0 0.0
    %346 = vmatprep.subr.mxu0 0.0
    %347 = vmatpush1.msra.mxu0 0.0
    %348 = vmatprep.subr.mxu0 0.0
    %349 = vmatpush1.msra.mxu0 0.0
    %350 = vmatprep.subr.mxu0 0.0
    %351 = vmatpush1.msra.mxu0 0.0
    %352 = vmatprep.subr.mxu0 0.0
    %353 = vmatpush1.msra.mxu0 0.0
    %354 = vmatprep.subr.mxu0 0.0
    %355 = vmatpush1.msra.mxu0 0.0
    %356 = vmatprep.subr.mxu0 0.0
    %357 = vmatpush1.msra.mxu0 0.0
    %358 = vmatprep.subr.mxu0 0.0
    %359 = vmatpush1.msra.mxu0 0.0
    %360 = vmatprep.subr.mxu0 0.0
    %361 = vmatpush1.msra.mxu0 0.0
    %362 = vmatprep.subr.mxu0 0.0
    %363 = vmatpush1.msra.mxu0 0.0
    %364 = vmatprep.subr.mxu0 0.0
    %365 = vmatpush1.msra.mxu0 0.0
    %366 = vmatprep.subr.mxu0 0.0
    %367 = vmatpush1.msra.mxu0 0.0
    %368 = vmatprep.subr.mxu0 0.0
    %369 = vmatpush1.msra.mxu0 0.0
    %370 = vmatprep.subr.mxu0 0.0
    %371 = vmatpush1.msra.mxu0 0.0
    %372 = vmatprep.subr.mxu0 0.0
    %373 = vmatpush1.msra.mxu0 0.0
    %374 = vmatprep.subr.mxu0 0.0
    %375 = vmatpush1.msra.mxu0 0.0
    %376 = vmatprep.subr.mxu0 0.0
    %377 = vmatpush1.msra.mxu0 0.0
    %378 = vmatprep.subr.mxu0 0.0
    %379 = vmatpush1.msra.mxu0 0.0
    %380 = vmatprep.subr.mxu0 0.0
    %381 = vmatpush1.msra.mxu0 0.0
    %382 = vmatprep.subr.mxu0 0.0
    %383 = vmatpush1.msra.mxu0 0.0
    %384 = vmatprep.subr.mxu0 0.0
    %385 = vmatpush1.msra.mxu0 0.0
    %386 = vmatprep.subr.mxu0 0.0
    %387 = vmatpush1.msra.mxu0 0.0
    %388 = vmatprep.subr.mxu0 0.0
    %389 = vmatpush1.msra.mxu0 0.0
    %390 = vmatprep.subr.mxu0 0.0
    %391 = vmatpush1.msra.mxu0 0.0
    %392 = vmatprep.subr.mxu0 0.0
    %393 = vmatpush1.msra.mxu0 0.0
    %394 = vmatprep.subr.mxu0 0.0
    %395 = vmatpush1.msra.mxu0 0.0
    %396 = vmatprep.subr.mxu0 0.0
    %397 = vmatpush1.msra.mxu0 0.0
    %398 = vmatprep.subr.mxu0 0.0
    %399 = vmatpush1.msra.mxu0 0.0
    %400 = vmatprep.subr.mxu0 0.0
    %401 = vmatpush1.msra.mxu0 0.0
    %402 = vmatprep.subr.mxu0 0.0
    %403 = vmatpush1.msra.mxu0 0.0
    %404 = vmatprep.mubr.f32.mxu0 0.0
    %405 = vmatmul.mubr.f32.gmra.mrb[0].mxu0 %v157
    %v406 = vpop.f32.mrb[0].mxu0
    %v407 = vadd.f32 0.0, %v406
    %v408 = vpop.f32.mrb[0].mxu0
    %409 = vmatprep.mubr.f32.mxu0 0.0
    %410 = vmatmul.mubr.f32.gmra.mrb[0].mxu0 %v160
    %v411 = vpop.f32.mrb[0].mxu0
    %v412 = vadd.f32 0.0, %v411
    %v413 = vpop.f32.mrb[0].mxu0
    %414 = vdwg.mxu0
    %v415 = vmul.f32 %v66, %v407
    %v416 = vmul.f32 %v68, %v412
    %v417 = vld [vmem:[%s5] sm:$0x1]
    %v419 = vlaneseq
    %v420 = vshrl.u32 %v419, 7
    %v421 = vsub.s32 0, %v420
    %v422 = vrot.slane %v417, %v421
    %v424 = vadd.f32 %v415, %v422
    %v425 = vadd.f32 %v416, %v422
    %426 = vst [vmem:[#allocation3] sm:$0xff] %v424
    %427 = vst [vmem:[#allocation3 + $0x8] sm:$0xff] %v425
    %v428 = vld [vmem:[%s6] sm:$0xff]
    %v429 = vld [vmem:[%s7] sm:$0xff]
    %v430 = vmul.f32 %v428, %v429
    %v431 = vrot.slane %v430, 4
    %v432 = vadd.f32 %v430, %v431
    %v433 = vrot.slane %v432, 2
    %v434 = vadd.f32 %v432, %v433
    %v435 = vrot.slane %v434, 1
    %v436 = vadd.f32 %v434, %v435
    %v437 = vlaneseq
    %v438 = vand.u32 %v437, 127
    %v439 = vld [vmem:[%s8] sm:$0xff]
    %v440 = vld [vmem:[%s8 + $0x8] sm:$0xff]
    %v441 = vld [vmem:[%s8 + $0x10] sm:$0xff]
    %v442 = vld [vmem:[%s8 + $0x18] sm:$0xff]
    %v443 = vld [vmem:[%s8 + $0x20] sm:$0xff]
    %v444 = vld [vmem:[%s8 + $0x28] sm:$0xff]
    %v445 = vld [vmem:[%s8 + $0x30] sm:$0xff]
    %v446 = vld [vmem:[%s8 + $0x38] sm:$0xff]
    %v447 = vld [vmem:[%s8 + $0x40] sm:$0xff]
    %v448 = vld [vmem:[%s8 + $0x48] sm:$0xff]
    %v449 = vld [vmem:[%s8 + $0x50] sm:$0xff]
    %v450 = vld [vmem:[%s8 + $0x58] sm:$0xff]
    %v451 = vld [vmem:[%s8 + $0x60] sm:$0xff]
    %v452 = vld [vmem:[%s8 + $0x68] sm:$0xff]
    %v453 = vld [vmem:[%s8 + $0x70] sm:$0xff]
    %v454 = vld [vmem:[%s8 + $0x78] sm:$0xff]
    %455 = vset.pattern.permute.xlu0 0
    %456 = vperm.xlu0 %455, %v439
    %v457 = vpop.permute.xlu0 %456
    %458 = vset.pattern.permute.xlu0 0
    %459 = vperm.xlu0 %458, %v440
    %v460 = vpop.permute.xlu0 %459
    %461 = vset.pattern.permute.xlu0 0
    %462 = vperm.xlu0 %461, %v441
    %v463 = vpop.permute.xlu0 %462
    %464 = vset.pattern.permute.xlu0 0
    %465 = vperm.xlu0 %464, %v442
    %v466 = vpop.permute.xlu0 %465
    %467 = vset.pattern.permute.xlu0 0
    %468 = vperm.xlu0 %467, %v443
    %v469 = vpop.permute.xlu0 %468
    %470 = vset.pattern.permute.xlu0 0
    %471 = vperm.xlu0 %470, %v444
    %v472 = vpop.permute.xlu0 %471
    %473 = vset.pattern.permute.xlu0 0
    %474 = vperm.xlu0 %473, %v445
    %v475 = vpop.permute.xlu0 %474
    %476 = vset.pattern.permute.xlu0 0
    %477 = vperm.xlu0 %476, %v446
    %v478 = vpop.permute.xlu0 %477
    %479 = vset.pattern.permute.xlu0 0
    %480 = vperm.xlu0 %479, %v447
    %v481 = vpop.permute.xlu0 %480
    %482 = vset.pattern.permute.xlu0 0
    %483 = vperm.xlu0 %482, %v448
    %v484 = vpop.permute.xlu0 %483
    %485 = vset.pattern.permute.xlu0 0
    %486 = vperm.xlu0 %485, %v449
    %v487 = vpop.permute.xlu0 %486
    %488 = vset.pattern.permute.xlu0 0
    %489 = vperm.xlu0 %488, %v450
    %v490 = vpop.permute.xlu0 %489
    %491 = vset.pattern.permute.xlu0 0
    %492 = vperm.xlu0 %491, %v451
    %v493 = vpop.permute.xlu0 %492
    %494 = vset.pattern.permute.xlu0 0
    %495 = vperm.xlu0 %494, %v452
    %v496 = vpop.permute.xlu0 %495
    %497 = vset.pattern.permute.xlu0 0
    %498 = vperm.xlu0 %497, %v453
    %v499 = vpop.permute.xlu0 %498
    %500 = vset.pattern.permute.xlu0 0
    %501 = vperm.xlu0 %500, %v454
    %v502 = vpop.permute.xlu0 %501
    %vm503 = vcmp.eq.s32.totalorder %v457, %v438
    %vm504 = vcmp.eq.s32.totalorder %v460, %v438
    %vm505 = vcmp.eq.s32.totalorder %v463, %v438
    %vm506 = vcmp.eq.s32.totalorder %v466, %v438
    %vm507 = vcmp.eq.s32.totalorder %v469, %v438
    %vm508 = vcmp.eq.s32.totalorder %v472, %v438
    %vm509 = vcmp.eq.s32.totalorder %v475, %v438
    %vm510 = vcmp.eq.s32.totalorder %v478, %v438
    %vm511 = vcmp.eq.s32.totalorder %v481, %v438
    %vm512 = vcmp.eq.s32.totalorder %v484, %v438
    %vm513 = vcmp.eq.s32.totalorder %v487, %v438
    %vm514 = vcmp.eq.s32.totalorder %v490, %v438
    %vm515 = vcmp.eq.s32.totalorder %v493, %v438
    %vm516 = vcmp.eq.s32.totalorder %v496, %v438
    %vm517 = vcmp.eq.s32.totalorder %v499, %v438
    %vm518 = vcmp.eq.s32.totalorder %v502, %v438
    %v519 = vsel %vm503, 1, 0
    %v520 = vsel %vm504, 1, 0
    %v521 = vsel %vm505, 1, 0
    %v522 = vsel %vm506, 1, 0
    %v523 = vsel %vm507, 1, 0
    %v524 = vsel %vm508, 1, 0
    %v525 = vsel %vm509, 1, 0
    %v526 = vsel %vm510, 1, 0
    %v527 = vsel %vm511, 1, 0
    %v528 = vsel %vm512, 1, 0
    %v529 = vsel %vm513, 1, 0
    %v530 = vsel %vm514, 1, 0
    %v531 = vsel %vm515, 1, 0
    %v532 = vsel %vm516, 1, 0
    %v533 = vsel %vm517, 1, 0
    %v534 = vsel %vm518, 1, 0
    %v535 = vcvt.s32.f32 %v519
    %v536 = vcvt.s32.f32 %v520
    %v537 = vcvt.s32.f32 %v521
    %v538 = vcvt.s32.f32 %v522
    %v539 = vcvt.s32.f32 %v523
    %v540 = vcvt.s32.f32 %v524
    %v541 = vcvt.s32.f32 %v525
    %v542 = vcvt.s32.f32 %v526
    %v543 = vcvt.s32.f32 %v527
    %v544 = vcvt.s32.f32 %v528
    %v545 = vcvt.s32.f32 %v529
    %v546 = vcvt.s32.f32 %v530
    %v547 = vcvt.s32.f32 %v531
    %v548 = vcvt.s32.f32 %v532
    %v549 = vcvt.s32.f32 %v533
    %v550 = vcvt.s32.f32 %v534
    %551 = vmatprep.subr.mxu0 0.0
    %552 = vmatpush1.msra.mxu0 %v535
    %553 = vmatprep.subr.mxu0 0.0
    %554 = vmatpush1.msra.mxu0 %v536
    %555 = vmatprep.subr.mxu0 0.0
    %556 = vmatpush1.msra.mxu0 %v537
    %557 = vmatprep.subr.mxu0 0.0
    %558 = vmatpush1.msra.mxu0 %v538
    %559 = vmatprep.subr.mxu0 0.0
    %560 = vmatpush1.msra.mxu0 %v539
    %561 = vmatprep.subr.mxu0 0.0
    %562 = vmatpush1.msra.mxu0 %v540
    %563 = vmatprep.subr.mxu0 0.0
    %564 = vmatpush1.msra.mxu0 %v541
    %565 = vmatprep.subr.mxu0 0.0
    %566 = vmatpush1.msra.mxu0 %v542
    %567 = vmatprep.subr.mxu0 0.0
    %568 = vmatpush1.msra.mxu0 %v543
    %569 = vmatprep.subr.mxu0 0.0
    %570 = vmatpush1.msra.mxu0 %v544
    %571 = vmatprep.subr.mxu0 0.0
    %572 = vmatpush1.msra.mxu0 %v545
    %573 = vmatprep.subr.mxu0 0.0
    %574 = vmatpush1.msra.mxu0 %v546
    %575 = vmatprep.subr.mxu0 0.0
    %576 = vmatpush1.msra.mxu0 %v547
    %577 = vmatprep.subr.mxu0 0.0
    %578 = vmatpush1.msra.mxu0 %v548
    %579 = vmatprep.subr.mxu0 0.0
    %580 = vmatpush1.msra.mxu0 %v549
    %581 = vmatprep.subr.mxu0 0.0
    %582 = vmatpush1.msra.mxu0 %v550
    %583 = vmatprep.subr.mxu0 0.0
    %584 = vmatpush1.msra.mxu0 0.0
    %585 = vmatprep.subr.mxu0 0.0
    %586 = vmatpush1.msra.mxu0 0.0
    %587 = vmatprep.subr.mxu0 0.0
    %588 = vmatpush1.msra.mxu0 0.0
    %589 = vmatprep.subr.mxu0 0.0
    %590 = vmatpush1.msra.mxu0 0.0
    %591 = vmatprep.subr.mxu0 0.0
    %592 = vmatpush1.msra.mxu0 0.0
    %593 = vmatprep.subr.mxu0 0.0
    %594 = vmatpush1.msra.mxu0 0.0
    %595 = vmatprep.subr.mxu0 0.0
    %596 = vmatpush1.msra.mxu0 0.0
    %597 = vmatprep.subr.mxu0 0.0
    %598 = vmatpush1.msra.mxu0 0.0
    %599 = vmatprep.subr.mxu0 0.0
    %600 = vmatpush1.msra.mxu0 0.0
    %601 = vmatprep.subr.mxu0 0.0
    %602 = vmatpush1.msra.mxu0 0.0
    %603 = vmatprep.subr.mxu0 0.0
    %604 = vmatpush1.msra.mxu0 0.0
    %605 = vmatprep.subr.mxu0 0.0
    %606 = vmatpush1.msra.mxu0 0.0
    %607 = vmatprep.subr.mxu0 0.0
    %608 = vmatpush1.msra.mxu0 0.0
    %609 = vmatprep.subr.mxu0 0.0
    %610 = vmatpush1.msra.mxu0 0.0
    %611 = vmatprep.subr.mxu0 0.0
    %612 = vmatpush1.msra.mxu0 0.0
    %613 = vmatprep.subr.mxu0 0.0
    %614 = vmatpush1.msra.mxu0 0.0
    %615 = vmatprep.mubr.f32.mxu0 0.0
    %616 = vmatmul.mubr.f32.gmra.mrb[0].mxu0 %v436
    %v617 = vpop.f32.mrb[0].mxu0
    %v618 = vadd.f32 0.0, %v617
    %v619 = vpop.f32.mrb[0].mxu0
    %620 = vdwg.mxu0
    %s621 = sld [smem:[#allocation2]]
    %v622 = vstv %s621
    %v623 = vmul.f32 %v618, %v622
    %vm624 = vcmask 57344
    %625 = vst.msk [vmem:[#allocation5] sm:$0x1] %vm624, %v623
    // Predicated region
    $region42: #{tpu_custom_call.1} parent=1 // pred_check
      _
    $region43: #{tpu_custom_call.1} parent=1 // pred_check_branch
      %627 = sbr.rel (0) target = $region45
    $region44: #{tpu_custom_call.1} parent=1 // pred_region
      %s629 = ssub.s32 256, 256
      %630 = vsyncadd [#allocation4], %s629
      %s631 = sshll.u32 [#allocation3], 4
      %s632 = int_to_ptr.vmem [resolvable:$true] %s631
      %637 = dma.vmem_to_hbm [thread:$0]  %s632, 256, %s10, [#allocation4], 128, 128, 8
    $region45: #{tpu_custom_call.1} parent=1 // pred_fallthru
      _
    // Predicated region
    $region46: #{tpu_custom_call.1} parent=1 // pred_check
      _
    $region47: #{tpu_custom_call.1} parent=1 // pred_check_branch
      %639 = sbr.rel (0) target = $region49
    $region48: #{tpu_custom_call.1} parent=1 // pred_region
      %s641 = ssub.s32 16, 16
      %642 = vsyncadd [#allocation6], %s641
      %s644 = sshll.u32 [#allocation5], 4
      %s645 = int_to_ptr.vmem [resolvable:$true] %s644
      %647 = dma.vmem_to_hbm [thread:$0]  %s645, 16, %s11, [#allocation6]
    $region49: #{tpu_custom_call.1} parent=1 // pred_fallthru
      _
    // Predicated region
    $region50: #{tpu_custom_call.1} parent=1 // pred_check
      _
    $region51: #{tpu_custom_call.1} parent=1 // pred_check_branch
      %649 = sbr.rel (0) target = $region53
    $region52: #{tpu_custom_call.1} parent=1 // pred_region
      %650 = dma.done [#allocation4], 256
    $region53: #{tpu_custom_call.1} parent=1 // pred_fallthru
      _
    // Predicated region
    $region54: #{tpu_custom_call.1} parent=1 // pred_check
      _
    $region55: #{tpu_custom_call.1} parent=1 // pred_check_branch
      %652 = sbr.rel (0) target = $region57
    $region56: #{tpu_custom_call.1} parent=1 // pred_region
      %653 = dma.done [#allocation6], 16
    $region57: #{tpu_custom_call.1} parent=1 // pred_fallthru
      _
    %654 = vsyncpa [#allocation4], 1
    %655 = vsyncpa [#allocation6], 1

</llo_original>
